<compile_context>
chip_gen: v7x
topology: tpu7x:2x2x1
jax: 0.10.0
libtpu: 0.0.40
codegen_flags: <defaults>
</compile_context>

<pallas_src>
import functools

import jax
import jax.numpy as jnp
from jax.experimental import pallas as pl
from jax.experimental.pallas import tpu as pltpu

_LANES = 128


def _mse_partial_kernel(x_ref, t_ref, part_ref, *, row_tile, acc_rows,
                        blocks_per_part, rows_total, need_mask):
    """Accumulates per-(acc_row, lane) partial sums of (x - t)^2 into part_ref."""
    p = pl.program_id(0)            # partition axis ("parallel")
    i = pl.program_id(1)            # streaming/reduction axis ("arbitrary")

    @pl.when(i == 0)
    def _():
        part_ref[...] = jnp.zeros_like(part_ref)

    # Load in native dtype, upcast on the VPU (halves HBM traffic for bf16).
    d = x_ref[...].astype(jnp.float32) - t_ref[...].astype(jnp.float32)

    groups = row_tile // acc_rows

    def fold(v):
        # (row_tile, 128) -> (1, acc_rows, 128): acc_rows/8 independent
        # accumulator vregs, pure VPU adds (the single cross-lane reduce
        # happens once, in the wrapper).  Multiple accumulator vregs keep the
        # dependent add chain short so v7x's short DMA steps stay HBM-bound.
        return v.reshape(1, groups, acc_rows, _LANES).sum(axis=1)

    if not need_mask:
        part_ref[...] += fold(d * d)
    else:
        # Unclamped *logical* row offset of this grid step.  Phantom steps
        # (p * bpp + i >= total_blocks, from the cdiv partition split) and the
        # partial trailing block mask themselves to zero here; the index_map
        # clamps their DMA onto the last real block so no OOB copy is issued.
        row0 = (p * blocks_per_part + i) * row_tile
        is_edge = row0 + row_tile > rows_total

        @pl.when(jnp.logical_not(is_edge))
        def _():
            # Common path: no iota / compare / select work.
            part_ref[...] += fold(d * d)

        @pl.when(is_edge)
        def _():
            rid = row0 + jax.lax.broadcasted_iota(jnp.int32, d.shape, 0)
            dm = jnp.where(rid < rows_total, d, 0.0)   # mask BEFORE square/accumulate
            part_ref[...] += fold(dm * dm)


def _default_num_parts():
    """2 on multi-TensorCore ("megacore") chips, 1 on single-TC chips."""
    try:
        kind = jax.devices()[0].device_kind.lower()
    except Exception:
        return 1
    return 2 if any(tag in kind for tag in ("v4", "v5p", "7")) else 1


def content_loss(x, target, *, row_tile=None, num_parts=None):
    """Returns (input_passthrough, mse_loss_scalar) -- matches ContentLoss.forward
    (input is returned unchanged; the MSE against `target` is the side product).

    row_tile:  rows (of 128 lanes) streamed per grid step.  Default targets
               ~2 MiB of input per step regardless of dtype width, clamped so
               each partition still gets a few pipelined steps.
    num_parts: leading "parallel" axis size; defaults to 2 on multi-TensorCore
               chips (v4/v5p/v7x) and 1 on single-TC chips (v5e/v6e).
    """
    assert x.shape == target.shape, "input/target shape mismatch"
    n = x.size
    in_dtype = x.dtype
    itemsize = jnp.dtype(in_dtype).itemsize

    # Lane-dense flat view (pure metadata reshape, no copy).
    xf = x.reshape(-1)
    tf = target.reshape(-1)

    rows = n // _LANES
    tail = n - rows * _LANES
    if tail:
        # Ragged tail (< 128 elements): tiny, do it in plain JAX instead of
        # jnp.pad-ing full copies of both tensors.
        xt = xf[rows * _LANES:].astype(jnp.float32)
        tt = tf[rows * _LANES:].astype(jnp.float32)
        tail_sum = jnp.sum((xt - tt) ** 2)
    else:
        tail_sum = jnp.zeros((), jnp.float32)

    if rows == 0:
        return x, tail_sum / jnp.float32(n)

    if tail:
        # TODO(synk): this prefix slice may still copy in the ragged case; a
        # fully copy-free ragged path needs 1-D blocks + flat-index masking.
        xf = xf[:rows * _LANES]
        tf = tf[:rows * _LANES]
    x2d = xf.reshape(rows, _LANES)
    t2d = tf.reshape(rows, _LANES)

    # --- tiling -----------------------------------------------------------
    # dtype-aware sublane multiple: 32-bit -> 8, 16-bit -> 16, 8-bit -> 32.
    sub_req = {4: 8, 2: 16, 1: 32}.get(itemsize, 8)

    if num_parts is None:
        num_parts = _default_num_parts()
    num_parts = max(1, int(num_parts))

    if row_tile is None:
        # ~2 MiB of input per tile per step, independent of dtype width.
        row_tile = max(sub_req, (2 * 1024 * 1024) // (_LANES * itemsize))
    # Keep at least ~4 grid steps per partition so the pipeline has depth.
    steps_cap = -(-rows // (num_parts * 4))                   # cdiv
    rt = min(int(row_tile), max(steps_cap, sub_req))
    rt = -(-rt // sub_req) * sub_req                          # round up to sublane multiple

    total_blocks = -(-rows // rt)                             # cdiv
    parts = min(num_parts, total_blocks)
    bpp = -(-total_blocks // parts)                           # cdiv: no silent parts=1 fallback
    need_mask = (rows % rt != 0) or (parts * bpp != total_blocks)

    # Several independent accumulator vreg-rows (up to 4 f32 vregs).
    acc_rows = 32 if rt % 32 == 0 else (16 if rt % 16 == 0 else 8)

    kernel = functools.partial(
        _mse_partial_kernel, row_tile=rt, acc_rows=acc_rows,
        blocks_per_part=bpp, rows_total=rows, need_mask=need_mask)

    last_block = total_blocks - 1

    def in_index_map(p, i):
        # Clamp phantom steps of the cdiv partition split onto the last real
        # block; their contribution is zeroed in-kernel via the unclamped
        # logical row id.
        return (jnp.minimum(p * bpp + i, last_block), 0)

    tile_bytes = rt * _LANES * itemsize
    # 2 inputs x 2 pipeline buffers + resident accumulator + slack.
    vmem_needed = 2 * 2 * tile_bytes + 2 * acc_rows * _LANES * 4 + (1 << 20)
    vmem_limit = None
    if vmem_needed > (12 << 20):
        # v5e's scoped-VMEM default is only 16 MiB; raise it for big tiles
        # (stay under v7x's 64 MiB physical VMEM).
        vmem_limit = int(min(vmem_needed + vmem_needed // 2, 64 << 20))

    cost = pl.CostEstimate(
        flops=3 * rows * _LANES,      # sub, mul, add per element
        transcendentals=0,
        bytes_accessed=2 * rows * _LANES * itemsize + parts * acc_rows * _LANES * 4)

    # TODO(synk): on v7x confirm via xprof that the leading "parallel" axis
    # shards across both TensorCores; if not, switch it to pltpu.CORE_PARALLEL
    # and sweep pipeline_mode=pl.Buffered(3) on the two input specs.
    partials = pl.pallas_call(
        kernel,
        out_shape=jax.ShapeDtypeStruct((parts, acc_rows, _LANES), jnp.float32),
        grid_spec=pltpu.PrefetchScalarGridSpec(
            num_scalar_prefetch=0,
            grid=(parts, bpp),
            in_specs=[
                pl.BlockSpec((rt, _LANES), in_index_map),
                pl.BlockSpec((rt, _LANES), in_index_map),
            ],
            # Same output block across the reduction axis -> resident accumulator.
            out_specs=pl.BlockSpec((1, acc_rows, _LANES), lambda p, i: (p, 0, 0)),
        ),
        compiler_params=pltpu.CompilerParams(
            dimension_semantics=("parallel", "arbitrary"),
            vmem_limit_bytes=vmem_limit),
        cost_estimate=cost,
    )(x2d, t2d)

    loss = (jnp.sum(partials) + tail_sum) / jnp.float32(n)
    # TODO(synk): the PyTorch module stores the loss on `self.loss` (stateful
    # side effect); here it is returned explicitly alongside the passthrough.
    return x, loss


if __name__ == "__main__":
    key = jax.random.PRNGKey(0)
    kx, kt = jax.random.split(key)

    # Primary check: small NCHW feature maps, consistent with what ContentLoss sees.
    shape = (2, 4, 16, 16)
    x = jax.random.normal(kx, shape, dtype=jnp.float32)
    target = jax.random.normal(kt, shape, dtype=jnp.float32)  # "detached" target

    out, loss = content_loss(x, target)
    jax.block_until_ready((out, loss))

    ref_loss = jnp.mean((x - target) ** 2)
    assert jnp.allclose(loss, ref_loss, rtol=1e-5, atol=1e-6), (loss, ref_loss)
    assert jnp.array_equal(out, x)

    # Check B: ragged size (numel % 128 != 0) + uneven partition split
    # (phantom blocks clamped + masked, partial last block masked).
    xb = jax.random.normal(kx, (2, 4, 18, 18), dtype=jnp.float32)
    tb = jax.random.normal(kt, (2, 4, 18, 18), dtype=jnp.float32)
    _, lb = content_loss(xb, tb, row_tile=8, num_parts=2)
    assert jnp.allclose(lb, jnp.mean((xb - tb) ** 2), rtol=1e-5, atol=1e-6)

    # Check C: multi-block grid, exact 2-way partition, unmasked fast path.
    xc = jax.random.normal(kt, (2, 4, 16, 32), dtype=jnp.float32)
    tc = jax.random.normal(kx, (2, 4, 16, 32), dtype=jnp.float32)
    _, lc = content_loss(xc, tc, row_tile=8, num_parts=2)
    assert jnp.allclose(lc, jnp.mean((xc - tc) ** 2), rtol=1e-5, atol=1e-6)

    # Check D: bf16 inputs (dtype-aware 16-sublane tiling, in-kernel upcast).
    xd = x.astype(jnp.bfloat16)
    td = target.astype(jnp.bfloat16)
    _, ld = content_loss(xd, td)
    ref_d = jnp.mean((xd.astype(jnp.float32) - td.astype(jnp.float32)) ** 2)
    assert jnp.allclose(ld, ref_d, rtol=1e-5, atol=1e-6)

    # Check E: larger input exercising the default (big-tile) path and the
    # multi-vreg accumulator (acc_rows=32).
    xe = jax.random.normal(kx, (2, 64, 64, 64), dtype=jnp.float32)
    te = jax.random.normal(kt, (2, 64, 64, 64), dtype=jnp.float32)
    _, le = content_loss(xe, te)
    assert jnp.allclose(le, jnp.mean((xe - te) ** 2), rtol=1e-4, atol=1e-6)

    jax.block_until_ready((lb, lc, ld, le))
    print("KERNEL_OK")
</pallas_src>

<mosaic_0001>
module attributes {stable_mosaic.version = 11 : i64} {
  func.func @_mse_partial_kernel(%arg0: i32, %arg1: i32, %arg2: memref<8x128xf32, #tpu.memory_space<vmem>>, %arg3: memref<8x128xf32, #tpu.memory_space<vmem>>, %arg4: memref<1x8x128xf32, #tpu.memory_space<vmem>>) attributes {dimension_semantics = [#tpu.dimension_semantics<parallel>, #tpu.dimension_semantics<arbitrary>], iteration_bounds = array<i64: 1, 2>, scalar_prefetch = 0 : i64, scratch_operands = 0 : i64, tpu.core_type = #tpu.core_type<tc>, window_params = [{transform_indices = @transform_0, window_bounds = array<i64: 8, 128>}, {transform_indices = @transform_1, window_bounds = array<i64: 8, 128>}, {transform_indices = @transform_2, window_bounds = array<i64: 1, 8, 128>}]} {
    %c0_i32 = arith.constant 0 : i32
    %0 = arith.cmpi eq, %arg1, %c0_i32 : i32
    %1 = arith.extui %0 : i1 to i32
    %c0_i32_0 = arith.constant 0 : i32
    %2 = arith.cmpi ne, %1, %c0_i32_0 : i32
    scf.if %2 {
      %cst_10 = arith.constant 0.000000e+00 : f32
      %12 = vector.broadcast %cst_10 : f32 to vector<1x8x128xf32>
      %c0_11 = arith.constant 0 : index
      %c0_12 = arith.constant 0 : index
      %c0_13 = arith.constant 0 : index
      %13 = vector.load %arg4[%c0_11, %c0_12, %c0_13] : memref<1x8x128xf32, #tpu.memory_space<vmem>>, vector<1x8x128xf32>
      tpu.vector_store %arg4[%c0_11, %c0_12, %c0_13], %12 {strides = array<i32>} : memref<1x8x128xf32, #tpu.memory_space<vmem>>, vector<1x8x128xf32>,
    } else {
    }
    %c0 = arith.constant 0 : index
    %c0_1 = arith.constant 0 : index
    %3 = vector.load %arg2[%c0, %c0_1] : memref<8x128xf32, #tpu.memory_space<vmem>>, vector<8x128xf32>
    %c0_2 = arith.constant 0 : index
    %c0_3 = arith.constant 0 : index
    %4 = vector.load %arg3[%c0_2, %c0_3] : memref<8x128xf32, #tpu.memory_space<vmem>>, vector<8x128xf32>
    %5 = arith.subf %3, %4 : vector<8x128xf32>
    %c0_4 = arith.constant 0 : index
    %c0_5 = arith.constant 0 : index
    %c0_6 = arith.constant 0 : index
    %6 = vector.load %arg4[%c0_4, %c0_5, %c0_6] : memref<1x8x128xf32, #tpu.memory_space<vmem>>, vector<1x8x128xf32>
    %7 = arith.mulf %5, %5 : vector<8x128xf32>
    %8 = vector.shape_cast %7 : vector<8x128xf32> to vector<1x1x8x128xf32>
    %cst = arith.constant dense<0.000000e+00> : vector<1x8x128xf32>
    %9 = vector.multi_reduction <add>, %8, %cst [1] : vector<1x1x8x128xf32> to vector<1x8x128xf32>
    %10 = arith.addf %6, %9 : vector<1x8x128xf32>
    %c0_7 = arith.constant 0 : index
    %c0_8 = arith.constant 0 : index
    %c0_9 = arith.constant 0 : index
    %11 = vector.load %arg4[%c0_7, %c0_8, %c0_9] : memref<1x8x128xf32, #tpu.memory_space<vmem>>, vector<1x8x128xf32>
    tpu.vector_store %arg4[%c0_7, %c0_8, %c0_9], %10 {strides = array<i32>} : memref<1x8x128xf32, #tpu.memory_space<vmem>>, vector<1x8x128xf32>,
    return
  }
  func.func @transform_0(%arg0: i32, %arg1: i32) -> (i32, i32) {
    %c2_i32 = arith.constant 2 : i32
    %0 = arith.muli %arg0, %c2_i32 : i32
    %1 = arith.addi %0, %arg1 : i32
    %c1_i32 = arith.constant 1 : i32
    %2 = arith.minsi %1, %c1_i32 : i32
    %c0_i32 = arith.constant 0 : i32
    %c0_i32_0 = arith.constant 0 : i32
    return %2, %c0_i32 : i32, i32
  }
  func.func @transform_1(%arg0: i32, %arg1: i32) -> (i32, i32) {
    %c2_i32 = arith.constant 2 : i32
    %0 = arith.muli %arg0, %c2_i32 : i32
    %1 = arith.addi %0, %arg1 : i32
    %c1_i32 = arith.constant 1 : i32
    %2 = arith.minsi %1, %c1_i32 : i32
    %c0_i32 = arith.constant 0 : i32
    %c0_i32_0 = arith.constant 0 : i32
    return %2, %c0_i32 : i32, i32
  }
  func.func @transform_2(%arg0: i32, %arg1: i32) -> (i32, i32, i32) {
    %c0_i32 = arith.constant 0 : i32
    %c0_i32_0 = arith.constant 0 : i32
    %c0_i32_1 = arith.constant 0 : i32
    return %arg0, %c0_i32, %c0_i32_0 : i32, i32, i32
  }
}

</mosaic_0001>

<llo_original>
// kernel: tpu_custom_call.1
$region0: #{tpu_custom_call.1}
  #allocation0 [shape = 'u32[]', space=smem, size = 0x4, offset = 0x4, fixed_abs, tag = 'smem constant byte address 0x4 - core index']
  #allocation1 [shape = 'u32[144,128]{1,0:T(1,128)}', space=vmem, size = 0x12000, scoped, tag = 'internal scratch']
  %s0 = inlined_call_operand.hbm [shape: f32[16,128], index: 0, kind: input, shape index: {}]
  %s1 = inlined_call_operand.hbm [shape: f32[16,128], index: 1, kind: input, shape index: {}]
  %s2 = inlined_call_operand.hbm [shape: f32[1,8,128], index: 2, kind: output, shape index: {}]
  %s3 = sld [smem:[#allocation0]]
  $region53: #{tpu_custom_call.1} parent=0
    _
  %s5 = ssub.s32 1, %s3
  %s6 = scalar_select 0, %s5, %s3
  $region1: #{tpu_custom_call.1} parent=0
    #allocation2 [shape = 'u8[8192]{0}', space=vmem, size = 0x2000, scoped, tag = 'input window, operand 0']
    #allocation3 [shape = 's32[2]{0}', space=sflag, size = 0x8, scoped, tag = 'scoped memory for tpu_custom_call.1']
    #allocation4 [shape = 's32[2]{0}', space=sflag, size = 0x8, scoped, tag = 'scoped memory for tpu_custom_call.1']
    #allocation5 [shape = 'u8[8192]{0}', space=vmem, size = 0x2000, scoped, tag = 'input window, operand 1']
    #allocation6 [shape = 's32[2]{0}', space=sflag, size = 0x8, scoped, tag = 'scoped memory for tpu_custom_call.1']
    #allocation7 [shape = 'u8[4096]{0}', space=vmem, size = 0x1000, scoped, tag = 'output window, operand 0, single buffered']
    %7 = vsyncpa [#allocation3], 0
    %s8 = scalar_lea.sflag [#allocation3], 1
    %9 = vsyncpa %s8, 0
    %10 = vsyncpa [#allocation6], 0
    %s11 = scalar_lea.sflag [#allocation6], 1
    %12 = vsyncpa %s11, 0
    %13 = vsyncpa [#allocation4], 0
    loop: start=0, step=1, limit=4
    $region2: #{tpu_custom_call.1} parent=1 // loop_pre_header
      _
    $region3: #{tpu_custom_call.1} parent=1 // loop_header
      %s15 = sphi 0, %s19
      %p16 = scmp.ge.s32.totalorder %s15, 4
      %s22 = sphi 0, %s34
      %s23 = sphi 0, %s30
      %s24 = sphi 0, %s22
      %s25 = sphi 0, %s23
      %s26 = sphi 0, %s24
      %s27 = sphi 0, %s25
      %s45 = sphi 0, %s47
      %s48 = sphi 0, %s45
      %s49 = sphi 0, %s48
      %s65 = sphi 0, %s49
      %s79 = sphi 0, %s81
      %s82 = sphi 0, %s79
      %s83 = sphi 0, %s82
      %s99 = sphi 0, %s83
      %s105 = sphi 0, %s107
      %s108 = sphi 0, %s105
      %s109 = sphi 0, %s108
      %s125 = sphi 0, %s109
    $region4: #{tpu_custom_call.1} parent=1 // loop_header_branch
      %18 = sbr.rel (%p16) target = $region8
    $region5: #{tpu_custom_call.1} parent=1 // loop_body
      %s20 = ssub.s32 %s15, 1
      %s21 = ssub.s32 %s15, 2
      %s28 = sadd.s32 1, %s23
      %p29 = scmp.ge.s32.totalorder %s28, 2
      %s30 = scalar_select %p29, 0, %s28
      %s31 = sadd.s32 1, %s22
      %s32 = scalar_select %p29, %s31, %s22
      %p33 = scmp.ge.s32.totalorder %s32, 1
      %s34 = scalar_select %p33, 0, %s32
      %s35 = smul.u32 %s22, 2
      %s36 = sadd.s32 %s35, %s23
      %p37 = scmp.lt.s32.totalorder %s36, 1
      %s38 = scalar_select %p37, %s36, 1
      %s39 = smul.u32 %s34, 2
      %s40 = sadd.s32 %s39, %s30
      %p41 = scmp.lt.s32.totalorder %s40, 1
      %s42 = scalar_select %p41, %s40, 1
      %s43 = ssub.s32 %s38, %s42
      %p44 = scmp.eq.s32.totalorder %s43, 0
      %s46 = sadd.s32 %s45, 1
      %s47 = scalar_select %p44, %s45, %s46
      %p50 = pneg %p44
      %p51 = scmp.eq.s32.totalorder %s15, 1
      %p52 = por %p50, %p51
      %p53 = scmp.ne.s32.totalorder %s45, %s48
      %p54 = scmp.eq.s32.totalorder %s15, 0
      %p55 = por %p53, %p54
      %p56 = scmp.ne.s32.totalorder %s45, %s48
      %p57 = scmp.eq.s32.totalorder %s20, 1
      %p58 = por %p56, %p57
      %p59 = scmp.ne.s32.totalorder %s48, %s49
      %p60 = scmp.eq.s32.totalorder %s20, 0
      %p61 = por %p59, %p60
      %p62 = scmp.ne.s32.totalorder %s48, %s49
      %p63 = scmp.eq.s32.totalorder %s21, 1
      %p64 = por %p62, %p63
      %p66 = scmp.ne.s32.totalorder %s49, %s65
      %p67 = scmp.eq.s32.totalorder %s21, 0
      %p68 = por %p66, %p67
      %s69 = smul.u32 %s22, 2
      %s70 = sadd.s32 %s69, %s23
      %p71 = scmp.lt.s32.totalorder %s70, 1
      %s72 = scalar_select %p71, %s70, 1
      %s73 = smul.u32 %s34, 2
      %s74 = sadd.s32 %s73, %s30
      %p75 = scmp.lt.s32.totalorder %s74, 1
      %s76 = scalar_select %p75, %s74, 1
      %s77 = ssub.s32 %s72, %s76
      %p78 = scmp.eq.s32.totalorder %s77, 0
      %s80 = sadd.s32 %s79, 1
      %s81 = scalar_select %p78, %s79, %s80
      %p84 = pneg %p78
      %p85 = scmp.eq.s32.totalorder %s15, 1
      %p86 = por %p84, %p85
      %p87 = scmp.ne.s32.totalorder %s79, %s82
      %p88 = scmp.eq.s32.totalorder %s15, 0
      %p89 = por %p87, %p88
      %p90 = scmp.ne.s32.totalorder %s79, %s82
      %p91 = scmp.eq.s32.totalorder %s20, 1
      %p92 = por %p90, %p91
      %p93 = scmp.ne.s32.totalorder %s82, %s83
      %p94 = scmp.eq.s32.totalorder %s20, 0
      %p95 = por %p93, %p94
      %p96 = scmp.ne.s32.totalorder %s82, %s83
      %p97 = scmp.eq.s32.totalorder %s21, 1
      %p98 = por %p96, %p97
      %p100 = scmp.ne.s32.totalorder %s83, %s99
      %p101 = scmp.eq.s32.totalorder %s21, 0
      %p102 = por %p100, %p101
      %s103 = ssub.s32 %s22, %s34
      %p104 = scmp.eq.s32.totalorder %s103, 0
      %s106 = sadd.s32 %s105, 1
      %s107 = scalar_select %p104, %s105, %s106
      %p110 = pneg %p104
      %p111 = scmp.eq.s32.totalorder %s15, 1
      %p112 = por %p110, %p111
      %p113 = scmp.ne.s32.totalorder %s105, %s108
      %p114 = scmp.eq.s32.totalorder %s15, 0
      %p115 = por %p113, %p114
      %p116 = scmp.ne.s32.totalorder %s105, %s108
      %p117 = scmp.eq.s32.totalorder %s20, 1
      %p118 = por %p116, %p117
      %p119 = scmp.ne.s32.totalorder %s108, %s109
      %p120 = scmp.eq.s32.totalorder %s20, 0
      %p121 = por %p119, %p120
      %p122 = scmp.ne.s32.totalorder %s108, %s109
      %p123 = scmp.eq.s32.totalorder %s21, 1
      %p124 = por %p122, %p123
      %p126 = scmp.ne.s32.totalorder %s109, %s125
      %p127 = scmp.eq.s32.totalorder %s21, 0
      %p128 = por %p126, %p127
      %p129 = scmp.le.s32.totalorder 1, %s15
      %p130 = scmp.lt.s32.totalorder %s15, 3
      %p131 = pnand %p129, %p130
      %p132 = pneg %p131
      // Predicated region
      $region9: #{tpu_custom_call.1} parent=5 // pred_check
        _
      $region10: #{tpu_custom_call.1} parent=5 // pred_check_branch
        %134 = sbr.rel (%p131) target = $region12
      $region11: #{tpu_custom_call.1} parent=5 // pred_region
        %s135 = ssub.s32 %s15, 1
      $region12: #{tpu_custom_call.1} parent=5 // pred_fallthru
        _
      %p136 = scmp.lt.s32.totalorder %s15, 2
      // Predicated region
      $region13: #{tpu_custom_call.1} parent=5 // pred_check
        %p137 = pneg %p136
      $region14: #{tpu_custom_call.1} parent=5 // pred_check_branch
        %139 = sbr.rel (%p137) target = $region16
      $region15: #{tpu_custom_call.1} parent=5 // pred_region
        // Predicated region
        $region17: #{tpu_custom_call.1} parent=15 // pred_check
          %p140 = pneg %p55
        $region18: #{tpu_custom_call.1} parent=15 // pred_check_branch
          %142 = sbr.rel (%p140) target = $region20
        $region19: #{tpu_custom_call.1} parent=15 // pred_region
          %s143 = sand.u32 %s45, 1
          %s144 = scalar_lea.sflag [#allocation3], %s143
          %s145 = sand.u32 %s45, 1
          %s146 = smul.addr %s145, 8
          %s147 = scalar_lea.vmem [#allocation2], %s146
          %s148 = smul.u32 %s22, 2
          %s149 = sadd.s32 %s148, %s23
          %p150 = scmp.lt.s32.totalorder %s149, 1
          %s151 = scalar_select %p150, %s149, 1
          %s153 = ssub.s32 128, 128
          %154 = vsyncadd %s144, %s153
          %s155 = smul.addr %s151, 128
          %s156 = scalar_lea.hbm %s0, %s155
          %s158 = sshll.u32 %s147, 4
          %s159 = int_to_ptr.vmem [resolvable:$true] %s158
          %161 = dma.hbm_to_vmem [thread:$0]  %s156, 128, %s159, %s144
        $region20: #{tpu_custom_call.1} parent=15 // pred_fallthru
          _
        // Predicated region
        $region21: #{tpu_custom_call.1} parent=15 // pred_check
          %p162 = pneg %p89
        $region22: #{tpu_custom_call.1} parent=15 // pred_check_branch
          %164 = sbr.rel (%p162) target = $region24
        $region23: #{tpu_custom_call.1} parent=15 // pred_region
          %s165 = sand.u32 %s79, 1
          %s166 = scalar_lea.sflag [#allocation6], %s165
          %s167 = sand.u32 %s79, 1
          %s168 = smul.addr %s167, 8
          %s169 = scalar_lea.vmem [#allocation5], %s168
          %s170 = smul.u32 %s22, 2
          %s171 = sadd.s32 %s170, %s23
          %p172 = scmp.lt.s32.totalorder %s171, 1
          %s173 = scalar_select %p172, %s171, 1
          %s175 = ssub.s32 128, 128
          %176 = vsyncadd %s166, %s175
          %s177 = smul.addr %s173, 128
          %s178 = scalar_lea.hbm %s1, %s177
          %s180 = sshll.u32 %s169, 4
          %s181 = int_to_ptr.vmem [resolvable:$true] %s180
          %183 = dma.hbm_to_vmem [thread:$0]  %s178, 128, %s181, %s166
        $region24: #{tpu_custom_call.1} parent=15 // pred_fallthru
          _
      $region16: #{tpu_custom_call.1} parent=5 // pred_fallthru
        _
      %p184 = scmp.le.s32.totalorder 1, %s15
      %p185 = scmp.lt.s32.totalorder %s15, 3
      %p186 = pnand %p184, %p185
      %p187 = pneg %p186
      // Predicated region
      $region25: #{tpu_custom_call.1} parent=5 // pred_check
        _
      $region26: #{tpu_custom_call.1} parent=5 // pred_check_branch
        %189 = sbr.rel (%p186) target = $region28
      $region27: #{tpu_custom_call.1} parent=5 // pred_region
        %s190 = ssub.s32 %s15, 1
        %s191 = sand.u32 %s48, 1
        %s192 = scalar_lea.sflag [#allocation3], %s191
        %s193 = sand.u32 %s48, 1
        %s194 = smul.addr %s193, 8
        %s195 = scalar_lea.vmem [#allocation2], %s194
        // Predicated region
        $region29: #{tpu_custom_call.1} parent=27 // pred_check
          %p196 = pneg %p61
        $region30: #{tpu_custom_call.1} parent=27 // pred_check_branch
          %198 = sbr.rel (%p196) target = $region32
        $region31: #{tpu_custom_call.1} parent=27 // pred_region
          %199 = dma.done %s192, 128
        $region32: #{tpu_custom_call.1} parent=27 // pred_fallthru
          _
        %s200 = sand.u32 %s82, 1
        %s201 = scalar_lea.sflag [#allocation6], %s200
        %s202 = sand.u32 %s82, 1
        %s203 = smul.addr %s202, 8
        %s204 = scalar_lea.vmem [#allocation5], %s203
        // Predicated region
        $region33: #{tpu_custom_call.1} parent=27 // pred_check
          %p205 = pneg %p95
        $region34: #{tpu_custom_call.1} parent=27 // pred_check_branch
          %207 = sbr.rel (%p205) target = $region36
        $region35: #{tpu_custom_call.1} parent=27 // pred_region
          %208 = dma.done %s201, 128
        $region36: #{tpu_custom_call.1} parent=27 // pred_fallthru
          _
        %s209 = sand.u32 %s48, 1
        %s210 = scalar_lea.sflag [#allocation3], %s209
        %s211 = sand.u32 %s48, 1
        %s212 = smul.addr %s211, 8
        %s213 = scalar_lea.vmem [#allocation2], %s212
        %p214 = pneg %p61
        %p215 = pneg %p58
        %s216 = sand.u32 %s82, 1
        %s217 = scalar_lea.sflag [#allocation6], %s216
        %s218 = sand.u32 %s82, 1
        %s219 = smul.addr %s218, 8
        %s220 = scalar_lea.vmem [#allocation5], %s219
        %p221 = pneg %p95
        %p222 = pneg %p92
        %p223 = pneg %p121
        %p224 = pneg %p118
        %s225 = smul.u32 %s24, 2
        %s226 = sadd.s32 %s225, %s25
        %p227 = scmp.lt.s32.totalorder %s226, 1
        %s228 = scalar_select %p227, %s226, 1
        %s229 = smul.u32 %s24, 2
        %s230 = sadd.s32 %s229, %s25
        %p231 = scmp.lt.s32.totalorder %s230, 1
        %s232 = scalar_select %p231, %s230, 1
        %p233 = scmp.eq.s32.totalorder %s25, 0
        // Predicated region
        $region37: #{tpu_custom_call.1} parent=27 // pred_check
          %p234 = pneg %p233
        $region38: #{tpu_custom_call.1} parent=27 // pred_check_branch
          %236 = sbr.rel (%p234) target = $region40
        $region39: #{tpu_custom_call.1} parent=27 // pred_region
          %237 = vst [vmem:[#allocation7] sm:$0xff] 0.0
        $region40: #{tpu_custom_call.1} parent=27 // pred_fallthru
          _
        %v238 = vld [vmem:[%s195] sm:$0xff]
        %v239 = vld [vmem:[%s204] sm:$0xff]
        %v240 = vsub.f32 %v238, %v239
        %v241 = vld [vmem:[#allocation7] sm:$0xff]
        %v242 = vmul.f32 %v240, %v240
        %v243 = vadd.f32 %v242, 0.0
        %v244 = vadd.f32 %v241, %v243
        %245 = vst [vmem:[#allocation7] sm:$0xff] %v244
        // Predicated region
        $region41: #{tpu_custom_call.1} parent=27 // pred_check
          %p246 = pneg %p118
        $region42: #{tpu_custom_call.1} parent=27 // pred_check_branch
          %248 = sbr.rel (%p246) target = $region44
        $region43: #{tpu_custom_call.1} parent=27 // pred_region
          %s250 = ssub.s32 128, 128
          %251 = vsyncadd [#allocation4], %s250
          %s252 = smul.addr %s24, 128
          %s253 = scalar_lea.hbm %s2, %s252
          %s255 = sshll.u32 [#allocation7], 4
          %s256 = int_to_ptr.vmem [resolvable:$true] %s255
          %258 = dma.vmem_to_hbm [thread:$0]  %s256, 128, %s253, [#allocation4]
        $region44: #{tpu_custom_call.1} parent=27 // pred_fallthru
          _
        // Predicated region
        $region45: #{tpu_custom_call.1} parent=27 // pred_check
          %p259 = pneg %p118
        $region46: #{tpu_custom_call.1} parent=27 // pred_check_branch
          %261 = sbr.rel (%p259) target = $region48
        $region47: #{tpu_custom_call.1} parent=27 // pred_region
          %262 = dma.done [#allocation4], 128
        $region48: #{tpu_custom_call.1} parent=27 // pred_fallthru
          _
      $region28: #{tpu_custom_call.1} parent=5 // pred_fallthru
        _
      %p263 = scmp.le.s32.totalorder 2, %s15
      // Predicated region
      $region49: #{tpu_custom_call.1} parent=5 // pred_check
        %p264 = pneg %p263
      $region50: #{tpu_custom_call.1} parent=5 // pred_check_branch
        %266 = sbr.rel (%p264) target = $region52
      $region51: #{tpu_custom_call.1} parent=5 // pred_region
        %s267 = ssub.s32 %s15, 2
      $region52: #{tpu_custom_call.1} parent=5 // pred_fallthru
        _
    $region6: #{tpu_custom_call.1} parent=1 // loop_footer
      %s19 = sadd.s32 1, %s15
    $region7: #{tpu_custom_call.1} parent=1 // loop_footer_branch
      %14 = sbr.rel target = $region3
    $region8: #{tpu_custom_call.1} parent=1 // loop_exit
      _
    %268 = vsyncpa [#allocation3], 1
    %s269 = scalar_lea.sflag [#allocation3], 1
    %270 = vsyncpa %s269, 1
    %271 = vsyncpa [#allocation6], 1
    %s272 = scalar_lea.sflag [#allocation6], 1
    %273 = vsyncpa %s272, 1
    %274 = vsyncpa [#allocation4], 1
    %s275 = scalar_lea.sflag [#allocation4], 1
    %276 = vsyncpa %s275, 1

</llo_original>
